<compile_context>
chip_gen: v5e
topology: v5e:2x2
jax: 0.10.0
libtpu: 0.0.40
codegen_flags: <defaults>
</compile_context>

<pallas_src>
import functools

import jax
import jax.numpy as jnp
from jax import lax
from jax.experimental import pallas as pl
from jax.experimental.pallas import tpu as pltpu


def _mlp_kernel(*refs, activation, num_layers, bf16_tanh):
    """refs = (x_ref, w0T, b0, w1T, b1, ..., w{L-1}T, b{L-1}, outT_ref).

    x_ref:    (tm, state_dim)   -- native layout tile (contiguous HBM DMA)
    w{i}T:    (out_dim, in_dim) -- transposed weights, resident in VMEM
    b{i}:     (out_dim, 1)      -- f32, broadcasts over the lane (batch) axis
    outT_ref: (act_dim, tm)     -- lane-dense (batch-on-lanes) output store
    """
    x_ref = refs[0]
    out_ref = refs[-1]
    wb = refs[1:-1]

    x = x_ref[...]  # (tm, state_dim), streamed dtype (f32 or bf16)

    h = None
    for i in range(num_layers):
        w = wb[2 * i][...]        # (out_dim, in_dim)
        b = wb[2 * i + 1][...]    # (out_dim, 1) f32
        if i == 0:
            # Contract BOTH operands on their feature axis ('oi,ni->on'):
            # (out, in) x (tm, in) -> (out, tm).  Batch lands on the 128-wide
            # lane axis with no transpose of x anywhere.  f32 accumulation.
            h = lax.dot_general(
                w, x.astype(w.dtype),
                dimension_numbers=(((1,), (1,)), ((), ())),
                preferred_element_type=jnp.float32,
            ) + b
        else:
            # (out, in) @ (in, tm) -> (out, tm), f32 accumulation.
            h = jnp.dot(w, h.astype(w.dtype),
                        preferred_element_type=jnp.float32) + b
        if i < num_layers - 1:    # final Linear has no activation
            if activation == "Tanh":
                if bf16_tanh:
                    # bf16 EUP path (v6e/v7x); h gets cast to w.dtype for the
                    # next dot anyway, so this also drops one explicit cast.
                    h = jnp.tanh(h.astype(jnp.bfloat16))
                else:
                    h = jnp.tanh(h)     # f32 EUP -- safe on v5e
            elif activation == "ReLU":
                h = jnp.maximum(h, 0.0)
            else:
                raise ValueError(f"unknown activation {activation}")
    out_ref[...] = h.astype(out_ref.dtype)


def _choose_tm(n, max_tm=4096, min_tm=128):
    """Pick a lane-aligned batch tile.

    Large tiles amortize the ~0.35 us per-grid-step overhead; keeping
    n_blocks >= 2 (when n allows) lets the "parallel" batch axis split across
    v7x's two TensorCores.  max_tm is VMEM-safe on all of v5e/v6e/v7x.
    """
    tm = pl.next_power_of_2(max(1, pl.cdiv(n, 2)))
    return max(min_tm, min(max_tm, tm))


def _has_bf16_eup():
    """True on chips with a bf16 transcendental path (v6e / v7x)."""
    try:
        kind = jax.devices()[0].device_kind.lower()
    except Exception:  # pragma: no cover - conservative fallback
        return False
    return not any(v in kind for v in ("v2", "v3", "v4", "v5"))


def _vmem_limit_bytes(tm, state_dim, act_dim, hidden_dim, stream_bytes):
    """Rough VMEM budget: double-buffered x/out tiles + f32 intermediates."""
    pad_lane = lambda d: -(-d // 128) * 128
    pad_sub = lambda d: -(-d // 8) * 8
    x_tile = pad_sub(tm) * pad_lane(state_dim) * stream_bytes * 2   # 2 bufs
    o_tile = pad_sub(act_dim) * tm * 4 * 2                          # 2 bufs
    h_live = 4 * pad_sub(hidden_dim) * tm * 4                       # f32 temps
    params = 512 * 1024                                             # resident
    slack = 2 * 1024 * 1024                                         # scratch
    est = x_tile + o_tile + h_live + params + slack
    # v5e scoped default is 16 MiB; v7x physical is 64 MiB -> stay inside.
    return int(min(max(est, 16 * 1024 * 1024), 64 * 1024 * 1024))


def solo_bc_forward(x, weights, biases, *, activation="Tanh", tm=None,
                    use_bf16_inputs=False, bf16_tanh=None,
                    feature_major_output=False):
    """Run the Solo_BC_ policy MLP forward pass with a Pallas TPU kernel.

    x:       (N, state_dim) float32 (any N; ragged last tile handled by Pallas)
    weights: list of (in_dim, out_dim) float32 arrays (y = x @ W + b convention)
    biases:  list of (out_dim,) float32 arrays
    tm:      batch tile (lane) width; multiple of 128.  None -> auto-choose.
    use_bf16_inputs: stream x and weights in bf16 (f32 accumulation).  Strongly
             recommended for perf runs, mandatory-ish on v5e; changes numerics.
    """
    assert x.ndim == 2
    N, state_dim = x.shape
    num_layers = len(weights)
    act_dim = weights[-1].shape[1]
    hidden_dim = weights[0].shape[1]

    if tm is None:
        tm = _choose_tm(N)
    assert tm % 128 == 0, "tm must be a multiple of 128 for lane-dense tiles"
    n_blocks = pl.cdiv(N, tm)

    stream_dtype = jnp.bfloat16 if use_bf16_inputs else jnp.float32
    stream_bytes = 2 if use_bf16_inputs else 4
    if bf16_tanh is None:
        bf16_tanh = use_bf16_inputs and _has_bf16_eup()

    # No transpose / zero-pad of x: f32 path streams x as-is (astype is a
    # no-op); bf16 path pays only the dtype cast.
    x_in = x.astype(stream_dtype)

    # Transposed weights (out, in) and column biases (out, 1).  Biases stay f32.
    weightsT = [jnp.asarray(w).T.astype(stream_dtype) for w in weights]
    biases2d = [jnp.asarray(b).reshape(-1, 1).astype(jnp.float32) for b in biases]

    # Full-extent BlockSpecs with constant index_maps -> fetched once, resident
    # in VMEM for all grid steps (~11 KB total).
    param_specs = []
    flat_params = []
    for w, b in zip(weightsT, biases2d):
        param_specs.append(pl.BlockSpec(w.shape, lambda i: (0, 0)))
        param_specs.append(pl.BlockSpec(b.shape, lambda i: (0, 0)))
        flat_params.extend([w, b])

    kernel = functools.partial(
        _mlp_kernel, activation=activation, num_layers=num_layers,
        bf16_tanh=bf16_tanh,
    )

    vmem_limit = _vmem_limit_bytes(tm, state_dim, act_dim, hidden_dim,
                                   stream_bytes)

    outT = pl.pallas_call(
        kernel,
        out_shape=jax.ShapeDtypeStruct((act_dim, N), jnp.float32),
        grid_spec=pltpu.PrefetchScalarGridSpec(
            num_scalar_prefetch=0,
            grid=(n_blocks,),
            in_specs=[pl.BlockSpec((tm, state_dim), lambda i: (i, 0))]
            + param_specs,
            out_specs=pl.BlockSpec((act_dim, tm), lambda i: (0, i)),
        ),
        compiler_params=pltpu.CompilerParams(
            dimension_semantics=("parallel",),  # batch tiles -> megacore split
            vmem_limit_bytes=vmem_limit,
        ),
    )(x_in, *flat_params)

    if feature_major_output:
        return outT                      # (act_dim, N), lane-dense
    return outT.T.astype(x.dtype)        # (N, act_dim), matches nn.Module


def _reference_forward(x, weights, biases, activation="Tanh"):
    h = x
    for i, (w, b) in enumerate(zip(weights, biases)):
        h = h @ w + b
        if i < len(weights) - 1:
            h = jnp.tanh(h) if activation == "Tanh" else jnp.maximum(h, 0.0)
    return h


if __name__ == "__main__":
    # args: state_dim=16, policy_hidden_dim=32, policy_num_hidden=2,
    #       policy_activation='Tanh', Box action space with shape (4,)
    state_dim = 16
    hidden_dim = 32
    num_hidden = 2
    action_dim = 4
    batch = 1000          # not a multiple of tm -> exercises ragged last block

    key = jax.random.PRNGKey(0)
    k_x, k_p = jax.random.split(key)
    x = jax.random.normal(k_x, (batch, state_dim), dtype=jnp.float32)

    # Deterministic parameter init (synthetic; shapes match the nn.Linear stack).
    layer_dims = (
        [(state_dim, hidden_dim)]
        + [(hidden_dim, hidden_dim)] * num_hidden
        + [(hidden_dim, action_dim)]
    )
    weights, biases = [], []
    for din, dout in layer_dims:
        kw, kb, k_p = jax.random.split(k_p, 3)
        scale = 1.0 / jnp.sqrt(jnp.float32(din))
        weights.append(
            jax.random.uniform(kw, (din, dout), jnp.float32, -scale, scale)
        )
        biases.append(
            jax.random.uniform(kb, (dout,), jnp.float32, -scale, scale)
        )

    # f32 streaming, Tanh, auto tm (-> tm=512, 2 grid blocks, ragged tail).
    ref_tanh = _reference_forward(x, weights, biases, activation="Tanh")
    out = solo_bc_forward(x, weights, biases, activation="Tanh")
    out = jax.block_until_ready(out)
    assert out.shape == (batch, action_dim)
    assert jnp.allclose(out, ref_tanh, atol=1e-4, rtol=1e-4), "f32 Tanh mismatch"

    # f32 streaming, ReLU, explicit smaller tile (-> 4 grid blocks).
    ref_relu = _reference_forward(x, weights, biases, activation="ReLU")
    out_relu = solo_bc_forward(x, weights, biases, activation="ReLU", tm=256)
    out_relu = jax.block_until_ready(out_relu)
    assert jnp.allclose(out_relu, ref_relu, atol=1e-4, rtol=1e-4), "ReLU mismatch"

    # bf16 streaming path (halves HBM read of x + MXU pushes; f32 accumulation;
    # bf16 tanh auto-enabled only on chips with a bf16 EUP): loose check.
    out_bf16 = solo_bc_forward(
        x, weights, biases, activation="Tanh", use_bf16_inputs=True
    )
    out_bf16 = jax.block_until_ready(out_bf16)
    assert out_bf16.shape == (batch, action_dim)
    assert jnp.allclose(out_bf16, ref_tanh, atol=5e-2, rtol=5e-2), "bf16 mismatch"

    print("KERNEL_OK")
</pallas_src>

<mosaic_0001>
module attributes {stable_mosaic.version = 11 : i64} {
  func.func @_mlp_kernel(%arg0: i32, %arg1: memref<512x16xf32, #tpu.memory_space<vmem>>, %arg2: memref<32x16xf32, #tpu.memory_space<vmem>>, %arg3: memref<32x1xf32, #tpu.memory_space<vmem>>, %arg4: memref<32x32xf32, #tpu.memory_space<vmem>>, %arg5: memref<32x1xf32, #tpu.memory_space<vmem>>, %arg6: memref<32x32xf32, #tpu.memory_space<vmem>>, %arg7: memref<32x1xf32, #tpu.memory_space<vmem>>, %arg8: memref<4x32xf32, #tpu.memory_space<vmem>>, %arg9: memref<4x1xf32, #tpu.memory_space<vmem>>, %arg10: memref<4x512xf32, #tpu.memory_space<vmem>>) attributes {dimension_semantics = [#tpu.dimension_semantics<parallel>], iteration_bounds = array<i64: 2>, scalar_prefetch = 0 : i64, scratch_operands = 0 : i64, tpu.core_type = #tpu.core_type<tc>, window_params = [{transform_indices = @transform_0, window_bounds = array<i64: 512, 16>}, {pipeline_mode = #tpu.pipeline_mode<synchronous>, transform_indices = @transform_1, window_bounds = array<i64: 32, 16>}, {pipeline_mode = #tpu.pipeline_mode<synchronous>, transform_indices = @transform_2, window_bounds = array<i64: 32, 1>}, {pipeline_mode = #tpu.pipeline_mode<synchronous>, transform_indices = @transform_3, window_bounds = array<i64: 32, 32>}, {pipeline_mode = #tpu.pipeline_mode<synchronous>, transform_indices = @transform_4, window_bounds = array<i64: 32, 1>}, {pipeline_mode = #tpu.pipeline_mode<synchronous>, transform_indices = @transform_5, window_bounds = array<i64: 32, 32>}, {pipeline_mode = #tpu.pipeline_mode<synchronous>, transform_indices = @transform_6, window_bounds = array<i64: 32, 1>}, {pipeline_mode = #tpu.pipeline_mode<synchronous>, transform_indices = @transform_7, window_bounds = array<i64: 4, 32>}, {pipeline_mode = #tpu.pipeline_mode<synchronous>, transform_indices = @transform_8, window_bounds = array<i64: 4, 1>}, {transform_indices = @transform_9, window_bounds = array<i64: 4, 512>}]} {
    %c0 = arith.constant 0 : index
    %c0_0 = arith.constant 0 : index
    %0 = vector.load %arg1[%c0, %c0_0] : memref<512x16xf32, #tpu.memory_space<vmem>>, vector<512x16xf32>
    %c0_1 = arith.constant 0 : index
    %c0_2 = arith.constant 0 : index
    %1 = vector.load %arg2[%c0_1, %c0_2] : memref<32x16xf32, #tpu.memory_space<vmem>>, vector<32x16xf32>
    %c0_3 = arith.constant 0 : index
    %c0_4 = arith.constant 0 : index
    %2 = vector.load %arg3[%c0_3, %c0_4] : memref<32x1xf32, #tpu.memory_space<vmem>>, vector<32x1xf32>
    %cst = arith.constant dense<0.000000e+00> : vector<32x512xf32>
    %3 = tpu.matmul %1, %0, %cst {dimension_numbers = #tpu.dot_dimension_numbers<[1], [1], [0], [0], [0, 0, 1, 0], [], []>} : vector<32x16xf32>, vector<512x16xf32>, vector<32x512xf32> -> vector<32x512xf32>
    %4 = vector.broadcast %2 : vector<32x1xf32> to vector<32x512xf32>
    %5 = arith.addf %3, %4 : vector<32x512xf32>
    %6 = math.tanh %5 : vector<32x512xf32>
    %c0_5 = arith.constant 0 : index
    %c0_6 = arith.constant 0 : index
    %7 = vector.load %arg4[%c0_5, %c0_6] : memref<32x32xf32, #tpu.memory_space<vmem>>, vector<32x32xf32>
    %c0_7 = arith.constant 0 : index
    %c0_8 = arith.constant 0 : index
    %8 = vector.load %arg5[%c0_7, %c0_8] : memref<32x1xf32, #tpu.memory_space<vmem>>, vector<32x1xf32>
    %cst_9 = arith.constant dense<0.000000e+00> : vector<32x512xf32>
    %9 = tpu.matmul %7, %6, %cst_9 {dimension_numbers = #tpu.dot_dimension_numbers<[1], [0], [0], [1], [0, 0, 1, 1], [], []>} : vector<32x32xf32>, vector<32x512xf32>, vector<32x512xf32> -> vector<32x512xf32>
    %10 = vector.broadcast %8 : vector<32x1xf32> to vector<32x512xf32>
    %11 = arith.addf %9, %10 : vector<32x512xf32>
    %12 = math.tanh %11 : vector<32x512xf32>
    %c0_10 = arith.constant 0 : index
    %c0_11 = arith.constant 0 : index
    %13 = vector.load %arg6[%c0_10, %c0_11] : memref<32x32xf32, #tpu.memory_space<vmem>>, vector<32x32xf32>
    %c0_12 = arith.constant 0 : index
    %c0_13 = arith.constant 0 : index
    %14 = vector.load %arg7[%c0_12, %c0_13] : memref<32x1xf32, #tpu.memory_space<vmem>>, vector<32x1xf32>
    %cst_14 = arith.constant dense<0.000000e+00> : vector<32x512xf32>
    %15 = tpu.matmul %13, %12, %cst_14 {dimension_numbers = #tpu.dot_dimension_numbers<[1], [0], [0], [1], [0, 0, 1, 1], [], []>} : vector<32x32xf32>, vector<32x512xf32>, vector<32x512xf32> -> vector<32x512xf32>
    %16 = vector.broadcast %14 : vector<32x1xf32> to vector<32x512xf32>
    %17 = arith.addf %15, %16 : vector<32x512xf32>
    %18 = math.tanh %17 : vector<32x512xf32>
    %c0_15 = arith.constant 0 : index
    %c0_16 = arith.constant 0 : index
    %19 = vector.load %arg8[%c0_15, %c0_16] : memref<4x32xf32, #tpu.memory_space<vmem>>, vector<4x32xf32>
    %c0_17 = arith.constant 0 : index
    %c0_18 = arith.constant 0 : index
    %20 = vector.load %arg9[%c0_17, %c0_18] : memref<4x1xf32, #tpu.memory_space<vmem>>, vector<4x1xf32>
    %cst_19 = arith.constant dense<0.000000e+00> : vector<4x512xf32>
    %21 = tpu.matmul %19, %18, %cst_19 {dimension_numbers = #tpu.dot_dimension_numbers<[1], [0], [0], [1], [0, 0, 1, 1], [], []>} : vector<4x32xf32>, vector<32x512xf32>, vector<4x512xf32> -> vector<4x512xf32>
    %22 = vector.broadcast %20 : vector<4x1xf32> to vector<4x512xf32>
    %23 = arith.addf %21, %22 : vector<4x512xf32>
    %c0_20 = arith.constant 0 : index
    %c0_21 = arith.constant 0 : index
    %24 = vector.load %arg10[%c0_20, %c0_21] : memref<4x512xf32, #tpu.memory_space<vmem>>, vector<4x512xf32>
    tpu.vector_store %arg10[%c0_20, %c0_21], %23 {strides = array<i32>} : memref<4x512xf32, #tpu.memory_space<vmem>>, vector<4x512xf32>,
    return
  }
  func.func @transform_0(%arg0: i32) -> (i32, i32) {
    %c0_i32 = arith.constant 0 : i32
    %c0_i32_0 = arith.constant 0 : i32
    return %arg0, %c0_i32 : i32, i32
  }
  func.func @transform_1(%arg0: i32) -> (i32, i32) {
    %c0_i32 = arith.constant 0 : i32
    %c0_i32_0 = arith.constant 0 : i32
    %c0_i32_1 = arith.constant 0 : i32
    return %c0_i32, %c0_i32_0 : i32, i32
  }
  func.func @transform_2(%arg0: i32) -> (i32, i32) {
    %c0_i32 = arith.constant 0 : i32
    %c0_i32_0 = arith.constant 0 : i32
    %c0_i32_1 = arith.constant 0 : i32
    return %c0_i32, %c0_i32_0 : i32, i32
  }
  func.func @transform_3(%arg0: i32) -> (i32, i32) {
    %c0_i32 = arith.constant 0 : i32
    %c0_i32_0 = arith.constant 0 : i32
    %c0_i32_1 = arith.constant 0 : i32
    return %c0_i32, %c0_i32_0 : i32, i32
  }
  func.func @transform_4(%arg0: i32) -> (i32, i32) {
    %c0_i32 = arith.constant 0 : i32
    %c0_i32_0 = arith.constant 0 : i32
    %c0_i32_1 = arith.constant 0 : i32
    return %c0_i32, %c0_i32_0 : i32, i32
  }
  func.func @transform_5(%arg0: i32) -> (i32, i32) {
    %c0_i32 = arith.constant 0 : i32
    %c0_i32_0 = arith.constant 0 : i32
    %c0_i32_1 = arith.constant 0 : i32
    return %c0_i32, %c0_i32_0 : i32, i32
  }
  func.func @transform_6(%arg0: i32) -> (i32, i32) {
    %c0_i32 = arith.constant 0 : i32
    %c0_i32_0 = arith.constant 0 : i32
    %c0_i32_1 = arith.constant 0 : i32
    return %c0_i32, %c0_i32_0 : i32, i32
  }
  func.func @transform_7(%arg0: i32) -> (i32, i32) {
    %c0_i32 = arith.constant 0 : i32
    %c0_i32_0 = arith.constant 0 : i32
    %c0_i32_1 = arith.constant 0 : i32
    return %c0_i32, %c0_i32_0 : i32, i32
  }
  func.func @transform_8(%arg0: i32) -> (i32, i32) {
    %c0_i32 = arith.constant 0 : i32
    %c0_i32_0 = arith.constant 0 : i32
    %c0_i32_1 = arith.constant 0 : i32
    return %c0_i32, %c0_i32_0 : i32, i32
  }
  func.func @transform_9(%arg0: i32) -> (i32, i32) {
    %c0_i32 = arith.constant 0 : i32
    %c0_i32_0 = arith.constant 0 : i32
    return %c0_i32, %arg0 : i32, i32
  }
}

</mosaic_0001>

<llo_original>
// kernel: tpu_custom_call.1
$region0: #{tpu_custom_call.1}
  #allocation0 [shape = 'u32[]', space=smem, size = 0x4, offset = 0x4, fixed_abs, tag = 'smem constant byte address 0x4 - core index']
  #allocation1 [shape = 'u32[72,128]{1,0:T(1,128)}', space=vmem, size = 0x9000, scoped, tag = 'internal scratch']
  %s0 = inlined_call_operand.vmem [shape: f32[1000,16], index: 0, kind: input, shape index: {}]
  %s1 = inlined_call_operand.vmem [shape: f32[32,16], index: 1, kind: input, shape index: {}]
  %s2 = inlined_call_operand.vmem [shape: f32[32,1], index: 2, kind: input, shape index: {}]
  %s3 = inlined_call_operand.vmem [shape: f32[32,32], index: 3, kind: input, shape index: {}]
  %s4 = inlined_call_operand.vmem [shape: f32[32,1], index: 4, kind: input, shape index: {}]
  %s5 = inlined_call_operand.vmem [shape: f32[32,32], index: 5, kind: input, shape index: {}]
  %s6 = inlined_call_operand.vmem [shape: f32[32,1], index: 6, kind: input, shape index: {}]
  %s7 = inlined_call_operand.vmem [shape: f32[4,32], index: 7, kind: input, shape index: {}]
  %s8 = inlined_call_operand.vmem [shape: f32[4,1], index: 8, kind: input, shape index: {}]
  %s9 = inlined_call_operand.hbm [shape: f32[4,1000], index: 9, kind: output, shape index: {}]
  %s10 = sld [smem:[#allocation0]]
  $region69: #{tpu_custom_call.1} parent=0
    _
  %s12 = ssub.s32 1, %s10
  %s13 = scalar_select 0, %s12, %s10
  $region1: #{tpu_custom_call.1} parent=0
    #allocation2 [shape = 'u8[16384]{0}', space=vmem, size = 0x4000, scoped, tag = 'output window, operand 0']
    #allocation3 [shape = 's32[2]{0}', space=sflag, size = 0x8, scoped, tag = 'scoped memory for tpu_custom_call.1']
    %14 = vsyncpa [#allocation3], 0
    %s15 = scalar_lea.sflag [#allocation3], 1
    %16 = vsyncpa %s15, 0
    loop: start=0, step=1, limit=4
    $region2: #{tpu_custom_call.1} parent=1 // loop_pre_header
      _
    $region3: #{tpu_custom_call.1} parent=1 // loop_header
      %s18 = sphi 0, %s22
      %p19 = scmp.ge.s32.totalorder %s18, 4
      %s28 = sphi 0, %s30
      %s31 = sphi 0, %s28
      %s32 = sphi 0, %s31
      %s48 = sphi 0, %s32
      %s52 = sphi 0, %s52
      %s54 = sphi 0, %s52
      %s55 = sphi 0, %s54
      %s69 = sphi 0, %s55
      %s73 = sphi 0, %s73
      %s75 = sphi 0, %s73
      %s76 = sphi 0, %s75
      %s90 = sphi 0, %s76
      %s94 = sphi 0, %s94
      %s96 = sphi 0, %s94
      %s97 = sphi 0, %s96
      %s111 = sphi 0, %s97
      %s115 = sphi 0, %s115
      %s117 = sphi 0, %s115
      %s118 = sphi 0, %s117
      %s132 = sphi 0, %s118
      %s136 = sphi 0, %s136
      %s138 = sphi 0, %s136
      %s139 = sphi 0, %s138
      %s153 = sphi 0, %s139
      %s157 = sphi 0, %s157
      %s159 = sphi 0, %s157
      %s160 = sphi 0, %s159
      %s174 = sphi 0, %s160
      %s178 = sphi 0, %s178
      %s180 = sphi 0, %s178
      %s181 = sphi 0, %s180
      %s195 = sphi 0, %s181
      %s199 = sphi 0, %s199
      %s201 = sphi 0, %s199
      %s202 = sphi 0, %s201
      %s216 = sphi 0, %s202
      %s222 = sphi 0, %s224
      %s225 = sphi 0, %s222
      %s226 = sphi 0, %s225
      %s242 = sphi 0, %s226
    $region4: #{tpu_custom_call.1} parent=1 // loop_header_branch
      %21 = sbr.rel (%p19) target = $region8
    $region5: #{tpu_custom_call.1} parent=1 // loop_body
      %s23 = ssub.s32 %s18, 1
      %s24 = ssub.s32 %s18, 2
      %s25 = sadd.s32 %s18, 1
      %s26 = ssub.s32 %s18, %s25
      %p27 = scmp.eq.s32.totalorder %s26, 0
      %s29 = sadd.s32 %s28, 1
      %s30 = scalar_select %p27, %s28, %s29
      %p33 = pneg %p27
      %p34 = scmp.eq.s32.totalorder %s18, 1
      %p35 = por %p33, %p34
      %p36 = scmp.ne.s32.totalorder %s28, %s31
      %p37 = scmp.eq.s32.totalorder %s18, 0
      %p38 = por %p36, %p37
      %p39 = scmp.ne.s32.totalorder %s28, %s31
      %p40 = scmp.eq.s32.totalorder %s23, 1
      %p41 = por %p39, %p40
      %p42 = scmp.ne.s32.totalorder %s31, %s32
      %p43 = scmp.eq.s32.totalorder %s23, 0
      %p44 = por %p42, %p43
      %p45 = scmp.ne.s32.totalorder %s31, %s32
      %p46 = scmp.eq.s32.totalorder %s24, 1
      %p47 = por %p45, %p46
      %p49 = scmp.ne.s32.totalorder %s32, %s48
      %p50 = scmp.eq.s32.totalorder %s24, 0
      %p51 = por %p49, %p50
      %s53 = sadd.s32 %s52, 1
      %p56 = scmp.eq.s32.totalorder %s18, 1
      %p57 = scmp.ne.s32.totalorder %s52, %s54
      %p58 = scmp.eq.s32.totalorder %s18, 0
      %p59 = por %p57, %p58
      %p60 = scmp.ne.s32.totalorder %s52, %s54
      %p61 = scmp.eq.s32.totalorder %s23, 1
      %p62 = por %p60, %p61
      %p63 = scmp.ne.s32.totalorder %s54, %s55
      %p64 = scmp.eq.s32.totalorder %s23, 0
      %p65 = por %p63, %p64
      %p66 = scmp.ne.s32.totalorder %s54, %s55
      %p67 = scmp.eq.s32.totalorder %s24, 1
      %p68 = por %p66, %p67
      %p70 = scmp.ne.s32.totalorder %s55, %s69
      %p71 = scmp.eq.s32.totalorder %s24, 0
      %p72 = por %p70, %p71
      %s74 = sadd.s32 %s73, 1
      %p77 = scmp.eq.s32.totalorder %s18, 1
      %p78 = scmp.ne.s32.totalorder %s73, %s75
      %p79 = scmp.eq.s32.totalorder %s18, 0
      %p80 = por %p78, %p79
      %p81 = scmp.ne.s32.totalorder %s73, %s75
      %p82 = scmp.eq.s32.totalorder %s23, 1
      %p83 = por %p81, %p82
      %p84 = scmp.ne.s32.totalorder %s75, %s76
      %p85 = scmp.eq.s32.totalorder %s23, 0
      %p86 = por %p84, %p85
      %p87 = scmp.ne.s32.totalorder %s75, %s76
      %p88 = scmp.eq.s32.totalorder %s24, 1
      %p89 = por %p87, %p88
      %p91 = scmp.ne.s32.totalorder %s76, %s90
      %p92 = scmp.eq.s32.totalorder %s24, 0
      %p93 = por %p91, %p92
      %s95 = sadd.s32 %s94, 1
      %p98 = scmp.eq.s32.totalorder %s18, 1
      %p99 = scmp.ne.s32.totalorder %s94, %s96
      %p100 = scmp.eq.s32.totalorder %s18, 0
      %p101 = por %p99, %p100
      %p102 = scmp.ne.s32.totalorder %s94, %s96
      %p103 = scmp.eq.s32.totalorder %s23, 1
      %p104 = por %p102, %p103
      %p105 = scmp.ne.s32.totalorder %s96, %s97
      %p106 = scmp.eq.s32.totalorder %s23, 0
      %p107 = por %p105, %p106
      %p108 = scmp.ne.s32.totalorder %s96, %s97
      %p109 = scmp.eq.s32.totalorder %s24, 1
      %p110 = por %p108, %p109
      %p112 = scmp.ne.s32.totalorder %s97, %s111
      %p113 = scmp.eq.s32.totalorder %s24, 0
      %p114 = por %p112, %p113
      %s116 = sadd.s32 %s115, 1
      %p119 = scmp.eq.s32.totalorder %s18, 1
      %p120 = scmp.ne.s32.totalorder %s115, %s117
      %p121 = scmp.eq.s32.totalorder %s18, 0
      %p122 = por %p120, %p121
      %p123 = scmp.ne.s32.totalorder %s115, %s117
      %p124 = scmp.eq.s32.totalorder %s23, 1
      %p125 = por %p123, %p124
      %p126 = scmp.ne.s32.totalorder %s117, %s118
      %p127 = scmp.eq.s32.totalorder %s23, 0
      %p128 = por %p126, %p127
      %p129 = scmp.ne.s32.totalorder %s117, %s118
      %p130 = scmp.eq.s32.totalorder %s24, 1
      %p131 = por %p129, %p130
      %p133 = scmp.ne.s32.totalorder %s118, %s132
      %p134 = scmp.eq.s32.totalorder %s24, 0
      %p135 = por %p133, %p134
      %s137 = sadd.s32 %s136, 1
      %p140 = scmp.eq.s32.totalorder %s18, 1
      %p141 = scmp.ne.s32.totalorder %s136, %s138
      %p142 = scmp.eq.s32.totalorder %s18, 0
      %p143 = por %p141, %p142
      %p144 = scmp.ne.s32.totalorder %s136, %s138
      %p145 = scmp.eq.s32.totalorder %s23, 1
      %p146 = por %p144, %p145
      %p147 = scmp.ne.s32.totalorder %s138, %s139
      %p148 = scmp.eq.s32.totalorder %s23, 0
      %p149 = por %p147, %p148
      %p150 = scmp.ne.s32.totalorder %s138, %s139
      %p151 = scmp.eq.s32.totalorder %s24, 1
      %p152 = por %p150, %p151
      %p154 = scmp.ne.s32.totalorder %s139, %s153
      %p155 = scmp.eq.s32.totalorder %s24, 0
      %p156 = por %p154, %p155
      %s158 = sadd.s32 %s157, 1
      %p161 = scmp.eq.s32.totalorder %s18, 1
      %p162 = scmp.ne.s32.totalorder %s157, %s159
      %p163 = scmp.eq.s32.totalorder %s18, 0
      %p164 = por %p162, %p163
      %p165 = scmp.ne.s32.totalorder %s157, %s159
      %p166 = scmp.eq.s32.totalorder %s23, 1
      %p167 = por %p165, %p166
      %p168 = scmp.ne.s32.totalorder %s159, %s160
      %p169 = scmp.eq.s32.totalorder %s23, 0
      %p170 = por %p168, %p169
      %p171 = scmp.ne.s32.totalorder %s159, %s160
      %p172 = scmp.eq.s32.totalorder %s24, 1
      %p173 = por %p171, %p172
      %p175 = scmp.ne.s32.totalorder %s160, %s174
      %p176 = scmp.eq.s32.totalorder %s24, 0
      %p177 = por %p175, %p176
      %s179 = sadd.s32 %s178, 1
      %p182 = scmp.eq.s32.totalorder %s18, 1
      %p183 = scmp.ne.s32.totalorder %s178, %s180
      %p184 = scmp.eq.s32.totalorder %s18, 0
      %p185 = por %p183, %p184
      %p186 = scmp.ne.s32.totalorder %s178, %s180
      %p187 = scmp.eq.s32.totalorder %s23, 1
      %p188 = por %p186, %p187
      %p189 = scmp.ne.s32.totalorder %s180, %s181
      %p190 = scmp.eq.s32.totalorder %s23, 0
      %p191 = por %p189, %p190
      %p192 = scmp.ne.s32.totalorder %s180, %s181
      %p193 = scmp.eq.s32.totalorder %s24, 1
      %p194 = por %p192, %p193
      %p196 = scmp.ne.s32.totalorder %s181, %s195
      %p197 = scmp.eq.s32.totalorder %s24, 0
      %p198 = por %p196, %p197
      %s200 = sadd.s32 %s199, 1
      %p203 = scmp.eq.s32.totalorder %s18, 1
      %p204 = scmp.ne.s32.totalorder %s199, %s201
      %p205 = scmp.eq.s32.totalorder %s18, 0
      %p206 = por %p204, %p205
      %p207 = scmp.ne.s32.totalorder %s199, %s201
      %p208 = scmp.eq.s32.totalorder %s23, 1
      %p209 = por %p207, %p208
      %p210 = scmp.ne.s32.totalorder %s201, %s202
      %p211 = scmp.eq.s32.totalorder %s23, 0
      %p212 = por %p210, %p211
      %p213 = scmp.ne.s32.totalorder %s201, %s202
      %p214 = scmp.eq.s32.totalorder %s24, 1
      %p215 = por %p213, %p214
      %p217 = scmp.ne.s32.totalorder %s202, %s216
      %p218 = scmp.eq.s32.totalorder %s24, 0
      %p219 = por %p217, %p218
      %s220 = ssub.s32 %s18, %s25
      %p221 = scmp.eq.s32.totalorder %s220, 0
      %s223 = sadd.s32 %s222, 1
      %s224 = scalar_select %p221, %s222, %s223
      %p227 = pneg %p221
      %p228 = scmp.eq.s32.totalorder %s18, 1
      %p229 = por %p227, %p228
      %p230 = scmp.ne.s32.totalorder %s222, %s225
      %p231 = scmp.eq.s32.totalorder %s18, 0
      %p232 = por %p230, %p231
      %p233 = scmp.ne.s32.totalorder %s222, %s225
      %p234 = scmp.eq.s32.totalorder %s23, 1
      %p235 = por %p233, %p234
      %p236 = scmp.ne.s32.totalorder %s225, %s226
      %p237 = scmp.eq.s32.totalorder %s23, 0
      %p238 = por %p236, %p237
      %p239 = scmp.ne.s32.totalorder %s225, %s226
      %p240 = scmp.eq.s32.totalorder %s24, 1
      %p241 = por %p239, %p240
      %p243 = scmp.ne.s32.totalorder %s226, %s242
      %p244 = scmp.eq.s32.totalorder %s24, 0
      %p245 = por %p243, %p244
      %p246 = scmp.le.s32.totalorder 1, %s18
      %p247 = scmp.lt.s32.totalorder %s18, 3
      %p248 = pnand %p246, %p247
      %p249 = pneg %p248
      // Predicated region
      $region9: #{tpu_custom_call.1} parent=5 // pred_check
        _
      $region10: #{tpu_custom_call.1} parent=5 // pred_check_branch
        %251 = sbr.rel (%p248) target = $region12
      $region11: #{tpu_custom_call.1} parent=5 // pred_region
        %s252 = ssub.s32 %s18, 1
        // Predicated region
        $region13: #{tpu_custom_call.1} parent=11 // pred_check
          %p253 = pneg %p65
        $region14: #{tpu_custom_call.1} parent=11 // pred_check_branch
          %255 = sbr.rel (%p253) target = $region16
        $region15: #{tpu_custom_call.1} parent=11 // pred_region
          _
        $region16: #{tpu_custom_call.1} parent=11 // pred_fallthru
          _
        // Predicated region
        $region17: #{tpu_custom_call.1} parent=11 // pred_check
          %p256 = pneg %p86
        $region18: #{tpu_custom_call.1} parent=11 // pred_check_branch
          %258 = sbr.rel (%p256) target = $region20
        $region19: #{tpu_custom_call.1} parent=11 // pred_region
          _
        $region20: #{tpu_custom_call.1} parent=11 // pred_fallthru
          _
        // Predicated region
        $region21: #{tpu_custom_call.1} parent=11 // pred_check
          %p259 = pneg %p107
        $region22: #{tpu_custom_call.1} parent=11 // pred_check_branch
          %261 = sbr.rel (%p259) target = $region24
        $region23: #{tpu_custom_call.1} parent=11 // pred_region
          _
        $region24: #{tpu_custom_call.1} parent=11 // pred_fallthru
          _
        // Predicated region
        $region25: #{tpu_custom_call.1} parent=11 // pred_check
          %p262 = pneg %p128
        $region26: #{tpu_custom_call.1} parent=11 // pred_check_branch
          %264 = sbr.rel (%p262) target = $region28
        $region27: #{tpu_custom_call.1} parent=11 // pred_region
          _
        $region28: #{tpu_custom_call.1} parent=11 // pred_fallthru
          _
        // Predicated region
        $region29: #{tpu_custom_call.1} parent=11 // pred_check
          %p265 = pneg %p149
        $region30: #{tpu_custom_call.1} parent=11 // pred_check_branch
          %267 = sbr.rel (%p265) target = $region32
        $region31: #{tpu_custom_call.1} parent=11 // pred_region
          _
        $region32: #{tpu_custom_call.1} parent=11 // pred_fallthru
          _
        // Predicated region
        $region33: #{tpu_custom_call.1} parent=11 // pred_check
          %p268 = pneg %p170
        $region34: #{tpu_custom_call.1} parent=11 // pred_check_branch
          %270 = sbr.rel (%p268) target = $region36
        $region35: #{tpu_custom_call.1} parent=11 // pred_region
          _
        $region36: #{tpu_custom_call.1} parent=11 // pred_fallthru
          _
        // Predicated region
        $region37: #{tpu_custom_call.1} parent=11 // pred_check
          %p271 = pneg %p191
        $region38: #{tpu_custom_call.1} parent=11 // pred_check_branch
          %273 = sbr.rel (%p271) target = $region40
        $region39: #{tpu_custom_call.1} parent=11 // pred_region
          _
        $region40: #{tpu_custom_call.1} parent=11 // pred_fallthru
          _
        // Predicated region
        $region41: #{tpu_custom_call.1} parent=11 // pred_check
          %p274 = pneg %p212
        $region42: #{tpu_custom_call.1} parent=11 // pred_check_branch
          %276 = sbr.rel (%p274) target = $region44
        $region43: #{tpu_custom_call.1} parent=11 // pred_region
          _
        $region44: #{tpu_custom_call.1} parent=11 // pred_fallthru
          _
      $region12: #{tpu_custom_call.1} parent=5 // pred_fallthru
        _
      %p277 = scmp.lt.s32.totalorder %s18, 2
      // Predicated region
      $region45: #{tpu_custom_call.1} parent=5 // pred_check
        %p278 = pneg %p277
      $region46: #{tpu_custom_call.1} parent=5 // pred_check_branch
        %280 = sbr.rel (%p278) target = $region48
      $region47: #{tpu_custom_call.1} parent=5 // pred_region
        // Predicated region
        $region49: #{tpu_custom_call.1} parent=47 // pred_check
          %p281 = pneg %p38
        $region50: #{tpu_custom_call.1} parent=47 // pred_check_branch
          %283 = sbr.rel (%p281) target = $region52
        $region51: #{tpu_custom_call.1} parent=47 // pred_region
          %s284 = smul.u32 64, %s18
          %s285 = ssub.s32 125, %s284
          %p286 = scmp.lt.s32.totalorder %s285, 64
          %s287 = scalar_select %p286, %s285, 64
          %s288 = smul.u32 8, %s287
          %p289 = scmp.lt.s32.totalorder %s284, 124
          %s290 = scalar_select %p289, %s284, 124
          %s291 = smul.addr %s290, 8
          %s292 = scalar_lea.vmem %s0, %s291
          %s293 = smul.u32 64, %s18
          %s294 = ssub.s32 125, %s293
          %p295 = scmp.lt.s32.totalorder %s294, 64
          %s296 = scalar_select %p295, %s294, 64
          %s297 = smul.u32 8, %s296
        $region52: #{tpu_custom_call.1} parent=47 // pred_fallthru
          _
      $region48: #{tpu_custom_call.1} parent=5 // pred_fallthru
        _
      %p298 = scmp.le.s32.totalorder 1, %s18
      %p299 = scmp.lt.s32.totalorder %s18, 3
      %p300 = pnand %p298, %p299
      %p301 = pneg %p300
      // Predicated region
      $region53: #{tpu_custom_call.1} parent=5 // pred_check
        _
      $region54: #{tpu_custom_call.1} parent=5 // pred_check_branch
        %303 = sbr.rel (%p300) target = $region56
      $region55: #{tpu_custom_call.1} parent=5 // pred_region
        %s304 = ssub.s32 %s18, 1
        %s305 = smul.u32 64, %s23
        %s306 = ssub.s32 125, %s305
        %p307 = scmp.lt.s32.totalorder %s306, 64
        %s308 = scalar_select %p307, %s306, 64
        %s309 = smul.u32 8, %s308
        %p310 = scmp.lt.s32.totalorder %s305, 124
        %s311 = scalar_select %p310, %s305, 124
        %s312 = smul.addr %s311, 8
        %s313 = scalar_lea.vmem %s0, %s312
        %p314 = pneg %p44
        %p315 = pneg %p41
        %p316 = pneg %p65
        %p317 = pneg %p62
        %p318 = pneg %p86
        %p319 = pneg %p83
        %p320 = pneg %p107
        %p321 = pneg %p104
        %p322 = pneg %p128
        %p323 = pneg %p125
        %p324 = pneg %p149
        %p325 = pneg %p146
        %p326 = pneg %p170
        %p327 = pneg %p167
        %p328 = pneg %p191
        %p329 = pneg %p188
        %p330 = pneg %p212
        %p331 = pneg %p209
        %p332 = pneg %p238
        %p333 = pneg %p235
        %s334 = sand.u32 %s225, 1
        %s335 = scalar_lea.sflag [#allocation3], %s334
        %s336 = sand.u32 %s225, 1
        %s337 = smul.addr %s336, 16
        %s338 = scalar_lea.vmem [#allocation2], %s337
        %s339 = smul.u32 64, %s23
        %s340 = ssub.s32 125, %s339
        %p341 = scmp.lt.s32.totalorder %s340, 64
        %s342 = scalar_select %p341, %s340, 64
        %s343 = smul.u32 8, %s342
        %p344 = scmp.lt.s32.totalorder %s339, 124
        %s345 = scalar_select %p344, %s339, 124
        %s346 = smul.addr %s345, 8
        %s347 = scalar_lea.vmem %s0, %s346
        %s348 = smul.u32 64, %s23
        %s349 = ssub.s32 125, %s348
        %p350 = scmp.lt.s32.totalorder %s349, 64
        %s351 = scalar_select %p350, %s349, 64
        %s352 = smul.u32 8, %s351
        %s353 = smul.u32 4, %s23
        %v354 = vld [vmem:[%s347] sm:$0xff]
        %v355 = vld [vmem:[%s347 + $0x8] sm:$0xff]
        %v356 = vld [vmem:[%s347 + $0x10] sm:$0xff]
        %v357 = vld [vmem:[%s347 + $0x18] sm:$0xff]
        %v358 = vld [vmem:[%s347 + $0x20] sm:$0xff]
        %v359 = vld [vmem:[%s347 + $0x28] sm:$0xff]
        %v360 = vld [vmem:[%s347 + $0x30] sm:$0xff]
        %v361 = vld [vmem:[%s347 + $0x38] sm:$0xff]
        %v362 = vld [vmem:[%s347 + $0x40] sm:$0xff]
        %v363 = vld [vmem:[%s347 + $0x48] sm:$0xff]
        %v364 = vld [vmem:[%s347 + $0x50] sm:$0xff]
        %v365 = vld [vmem:[%s347 + $0x58] sm:$0xff]
        %v366 = vld [vmem:[%s347 + $0x60] sm:$0xff]
        %v367 = vld [vmem:[%s347 + $0x68] sm:$0xff]
        %v368 = vld [vmem:[%s347 + $0x70] sm:$0xff]
        %v369 = vld [vmem:[%s347 + $0x78] sm:$0xff]
        %v370 = vld [vmem:[%s347 + $0x80] sm:$0xff]
        %v371 = vld [vmem:[%s347 + $0x88] sm:$0xff]
        %v372 = vld [vmem:[%s347 + $0x90] sm:$0xff]
        %v373 = vld [vmem:[%s347 + $0x98] sm:$0xff]
        %v374 = vld [vmem:[%s347 + $0xa0] sm:$0xff]
        %v375 = vld [vmem:[%s347 + $0xa8] sm:$0xff]
        %v376 = vld [vmem:[%s347 + $0xb0] sm:$0xff]
        %v377 = vld [vmem:[%s347 + $0xb8] sm:$0xff]
        %v378 = vld [vmem:[%s347 + $0xc0] sm:$0xff]
        %v379 = vld [vmem:[%s347 + $0xc8] sm:$0xff]
        %v380 = vld [vmem:[%s347 + $0xd0] sm:$0xff]
        %v381 = vld [vmem:[%s347 + $0xd8] sm:$0xff]
        %v382 = vld [vmem:[%s347 + $0xe0] sm:$0xff]
        %v383 = vld [vmem:[%s347 + $0xe8] sm:$0xff]
        %v384 = vld [vmem:[%s347 + $0xf0] sm:$0xff]
        %v385 = vld [vmem:[%s347 + $0xf8] sm:$0xff]
        %v386 = vld [vmem:[%s347 + $0x100] sm:$0xff]
        %v387 = vld [vmem:[%s347 + $0x108] sm:$0xff]
        %v388 = vld [vmem:[%s347 + $0x110] sm:$0xff]
        %v389 = vld [vmem:[%s347 + $0x118] sm:$0xff]
        %v390 = vld [vmem:[%s347 + $0x120] sm:$0xff]
        %v391 = vld [vmem:[%s347 + $0x128] sm:$0xff]
        %v392 = vld [vmem:[%s347 + $0x130] sm:$0xff]
        %v393 = vld [vmem:[%s347 + $0x138] sm:$0xff]
        %v394 = vld [vmem:[%s347 + $0x140] sm:$0xff]
        %v395 = vld [vmem:[%s347 + $0x148] sm:$0xff]
        %v396 = vld [vmem:[%s347 + $0x150] sm:$0xff]
        %v397 = vld [vmem:[%s347 + $0x158] sm:$0xff]
        %v398 = vld [vmem:[%s347 + $0x160] sm:$0xff]
        %v399 = vld [vmem:[%s347 + $0x168] sm:$0xff]
        %v400 = vld [vmem:[%s347 + $0x170] sm:$0xff]
        %v401 = vld [vmem:[%s347 + $0x178] sm:$0xff]
        %v402 = vld [vmem:[%s347 + $0x180] sm:$0xff]
        %v403 = vld [vmem:[%s347 + $0x188] sm:$0xff]
        %v404 = vld [vmem:[%s347 + $0x190] sm:$0xff]
        %v405 = vld [vmem:[%s347 + $0x198] sm:$0xff]
        %v406 = vld [vmem:[%s347 + $0x1a0] sm:$0xff]
        %v407 = vld [vmem:[%s347 + $0x1a8] sm:$0xff]
        %v408 = vld [vmem:[%s347 + $0x1b0] sm:$0xff]
        %v409 = vld [vmem:[%s347 + $0x1b8] sm:$0xff]
        %v410 = vld [vmem:[%s347 + $0x1c0] sm:$0xff]
        %v411 = vld [vmem:[%s347 + $0x1c8] sm:$0xff]
        %v412 = vld [vmem:[%s347 + $0x1d0] sm:$0xff]
        %v413 = vld [vmem:[%s347 + $0x1d8] sm:$0xff]
        %v414 = vld [vmem:[%s347 + $0x1e0] sm:$0xff]
        %v415 = vld [vmem:[%s347 + $0x1e8] sm:$0xff]
        %v416 = vld [vmem:[%s347 + $0x1f0] sm:$0xff]
        %v417 = vld [vmem:[%s347 + $0x1f8] sm:$0xff]
        %v418 = vld [vmem:[%s1] sm:$0xff]
        %v419 = vld [vmem:[%s1 + $0x8] sm:$0xff]
        %v420 = vld [vmem:[%s1 + $0x10] sm:$0xff]
        %v421 = vld [vmem:[%s1 + $0x18] sm:$0xff]
        %v422 = vld [vmem:[%s2] sm:$0xff]
        %v423 = vld [vmem:[%s2 + $0x8] sm:$0xff]
        %v424 = vld [vmem:[%s2 + $0x10] sm:$0xff]
        %v425 = vld [vmem:[%s2 + $0x18] sm:$0xff]
        %427 = vset.pattern.permute.xlu0 0
        %428 = vperm.xlu0 %427, %v422
        %v429 = vpop.permute.xlu0 %428
        %432 = vset.pattern.permute.xlu0 0
        %433 = vperm.xlu0 %432, %v423
        %v434 = vpop.permute.xlu0 %433
        %437 = vset.pattern.permute.xlu0 0
        %438 = vperm.xlu0 %437, %v424
        %v439 = vpop.permute.xlu0 %438
        %442 = vset.pattern.permute.xlu0 0
        %443 = vperm.xlu0 %442, %v425
        %v444 = vpop.permute.xlu0 %443
        %vm446 = vcmask 130048
        %v448 = vsel %vm446, %v418, 0
        %v451 = vsel %vm446, %v419, 0
        %v454 = vsel %vm446, %v420, 0
        %v457 = vsel %vm446, %v421, 0
        %v460 = vsel %vm446, %v354, 0
        %v463 = vsel %vm446, %v355, 0
        %v466 = vsel %vm446, %v356, 0
        %v469 = vsel %vm446, %v357, 0
        %v472 = vsel %vm446, %v358, 0
        %v475 = vsel %vm446, %v359, 0
        %v478 = vsel %vm446, %v360, 0
        %v481 = vsel %vm446, %v361, 0
        %v484 = vsel %vm446, %v362, 0
        %v487 = vsel %vm446, %v363, 0
        %v490 = vsel %vm446, %v364, 0
        %v493 = vsel %vm446, %v365, 0
        %v496 = vsel %vm446, %v366, 0
        %v499 = vsel %vm446, %v367, 0
        %v502 = vsel %vm446, %v368, 0
        %v505 = vsel %vm446, %v369, 0
        %v508 = vsel %vm446, %v370, 0
        %v511 = vsel %vm446, %v371, 0
        %v514 = vsel %vm446, %v372, 0
        %v517 = vsel %vm446, %v373, 0
        %v520 = vsel %vm446, %v374, 0
        %v523 = vsel %vm446, %v375, 0
        %v526 = vsel %vm446, %v376, 0
        %v529 = vsel %vm446, %v377, 0
        %v532 = vsel %vm446, %v378, 0
        %v535 = vsel %vm446, %v379, 0
        %v538 = vsel %vm446, %v380, 0
        %v541 = vsel %vm446, %v381, 0
        %v544 = vsel %vm446, %v382, 0
        %v547 = vsel %vm446, %v383, 0
        %v550 = vsel %vm446, %v384, 0
        %v553 = vsel %vm446, %v385, 0
        %v556 = vsel %vm446, %v386, 0
        %v559 = vsel %vm446, %v387, 0
        %v562 = vsel %vm446, %v388, 0
        %v565 = vsel %vm446, %v389, 0
        %v568 = vsel %vm446, %v390, 0
        %v571 = vsel %vm446, %v391, 0
        %v574 = vsel %vm446, %v392, 0
        %v577 = vsel %vm446, %v393, 0
        %v580 = vsel %vm446, %v394, 0
        %v583 = vsel %vm446, %v395, 0
        %v586 = vsel %vm446, %v396, 0
        %v589 = vsel %vm446, %v397, 0
        %v592 = vsel %vm446, %v398, 0
        %v595 = vsel %vm446, %v399, 0
        %v598 = vsel %vm446, %v400, 0
        %v601 = vsel %vm446, %v401, 0
        %v604 = vsel %vm446, %v402, 0
        %v607 = vsel %vm446, %v403, 0
        %v610 = vsel %vm446, %v404, 0
        %v613 = vsel %vm446, %v405, 0
        %v616 = vsel %vm446, %v406, 0
        %v619 = vsel %vm446, %v407, 0
        %v622 = vsel %vm446, %v408, 0
        %v625 = vsel %vm446, %v409, 0
        %v628 = vsel %vm446, %v410, 0
        %v631 = vsel %vm446, %v411, 0
        %v634 = vsel %vm446, %v412, 0
        %v637 = vsel %vm446, %v413, 0
        %v640 = vsel %vm446, %v414, 0
        %v643 = vsel %vm446, %v415, 0
        %v646 = vsel %vm446, %v416, 0
        %v649 = vsel %vm446, %v417, 0
        %651 = vmatpush.xpose.msra.mxu0 %v505
        %652 = vmatpush.xpose.msra.mxu0 %v502
        %653 = vmatpush.xpose.msra.mxu0 %v499
        %654 = vmatpush.xpose.msra.mxu0 %v496
        %655 = vmatpush.xpose.msra.mxu0 %v493
        %656 = vmatpush.xpose.msra.mxu0 %v490
        %657 = vmatpush.xpose.msra.mxu0 %v487
        %658 = vmatpush.xpose.msra.mxu0 %v484
        %659 = vmatpush.xpose.msra.mxu0 %v481
        %660 = vmatpush.xpose.msra.mxu0 %v478
        %661 = vmatpush.xpose.msra.mxu0 %v475
        %662 = vmatpush.xpose.msra.mxu0 %v472
        %663 = vmatpush.xpose.msra.mxu0 %v469
        %664 = vmatpush.xpose.msra.mxu0 %v466
        %665 = vmatpush.xpose.msra.mxu0 %v463
        %666 = vmatpush.xpose.msra.mxu0 %v460
        %667 = vmatmul.f32.gmra.mxu0 %v448
        %v668 = vpop.f32.mrf.mxu0
        %v669 = vadd.f32 %v429, %v668
        %670 = vmatmul.f32.gmra.mxu0 %v451
        %v671 = vpop.f32.mrf.mxu0
        %v672 = vadd.f32 %v434, %v671
        %673 = vmatmul.f32.gmra.mxu0 %v454
        %v674 = vpop.f32.mrf.mxu0
        %v675 = vadd.f32 %v439, %v674
        %676 = vmatmul.f32.gmra.mxu0 %v457
        %v677 = vpop.f32.mrf.mxu0
        %v678 = vadd.f32 %v444, %v677
        %679 = vdwg.mxu0
        %680 = vmatpush.xpose.msra.mxu0 %v553
        %681 = vmatpush.xpose.msra.mxu0 %v550
        %682 = vmatpush.xpose.msra.mxu0 %v547
        %683 = vmatpush.xpose.msra.mxu0 %v544
        %684 = vmatpush.xpose.msra.mxu0 %v541
        %685 = vmatpush.xpose.msra.mxu0 %v538
        %686 = vmatpush.xpose.msra.mxu0 %v535
        %687 = vmatpush.xpose.msra.mxu0 %v532
        %688 = vmatpush.xpose.msra.mxu0 %v529
        %689 = vmatpush.xpose.msra.mxu0 %v526
        %690 = vmatpush.xpose.msra.mxu0 %v523
        %691 = vmatpush.xpose.msra.mxu0 %v520
        %692 = vmatpush.xpose.msra.mxu0 %v517
        %693 = vmatpush.xpose.msra.mxu0 %v514
        %694 = vmatpush.xpose.msra.mxu0 %v511
        %695 = vmatpush.xpose.msra.mxu0 %v508
        %696 = vmatmul.f32.gmra.mxu0 %v448
        %v697 = vpop.f32.mrf.mxu0
        %v698 = vadd.f32 %v429, %v697
        %699 = vmatmul.f32.gmra.mxu0 %v451
        %v700 = vpop.f32.mrf.mxu0
        %v701 = vadd.f32 %v434, %v700
        %702 = vmatmul.f32.gmra.mxu0 %v454
        %v703 = vpop.f32.mrf.mxu0
        %v704 = vadd.f32 %v439, %v703
        %705 = vmatmul.f32.gmra.mxu0 %v457
        %v706 = vpop.f32.mrf.mxu0
        %v707 = vadd.f32 %v444, %v706
        %708 = vdwg.mxu0
        %709 = vmatpush.xpose.msra.mxu0 %v601
        %710 = vmatpush.xpose.msra.mxu0 %v598
        %711 = vmatpush.xpose.msra.mxu0 %v595
        %712 = vmatpush.xpose.msra.mxu0 %v592
        %713 = vmatpush.xpose.msra.mxu0 %v589
        %714 = vmatpush.xpose.msra.mxu0 %v586
        %715 = vmatpush.xpose.msra.mxu0 %v583
        %716 = vmatpush.xpose.msra.mxu0 %v580
        %717 = vmatpush.xpose.msra.mxu0 %v577
        %718 = vmatpush.xpose.msra.mxu0 %v574
        %719 = vmatpush.xpose.msra.mxu0 %v571
        %720 = vmatpush.xpose.msra.mxu0 %v568
        %721 = vmatpush.xpose.msra.mxu0 %v565
        %722 = vmatpush.xpose.msra.mxu0 %v562
        %723 = vmatpush.xpose.msra.mxu0 %v559
        %724 = vmatpush.xpose.msra.mxu0 %v556
        %725 = vmatmul.f32.gmra.mxu0 %v448
        %v726 = vpop.f32.mrf.mxu0
        %v727 = vadd.f32 %v429, %v726
        %728 = vmatmul.f32.gmra.mxu0 %v451
        %v729 = vpop.f32.mrf.mxu0
        %v730 = vadd.f32 %v434, %v729
        %731 = vmatmul.f32.gmra.mxu0 %v454
        %v732 = vpop.f32.mrf.mxu0
        %v733 = vadd.f32 %v439, %v732
        %734 = vmatmul.f32.gmra.mxu0 %v457
        %v735 = vpop.f32.mrf.mxu0
        %v736 = vadd.f32 %v444, %v735
        %737 = vdwg.mxu0
        %738 = vmatpush.xpose.msra.mxu0 %v649
        %739 = vmatpush.xpose.msra.mxu0 %v646
        %740 = vmatpush.xpose.msra.mxu0 %v643
        %741 = vmatpush.xpose.msra.mxu0 %v640
        %742 = vmatpush.xpose.msra.mxu0 %v637
        %743 = vmatpush.xpose.msra.mxu0 %v634
        %744 = vmatpush.xpose.msra.mxu0 %v631
        %745 = vmatpush.xpose.msra.mxu0 %v628
        %746 = vmatpush.xpose.msra.mxu0 %v625
        %747 = vmatpush.xpose.msra.mxu0 %v622
        %748 = vmatpush.xpose.msra.mxu0 %v619
        %749 = vmatpush.xpose.msra.mxu0 %v616
        %750 = vmatpush.xpose.msra.mxu0 %v613
        %751 = vmatpush.xpose.msra.mxu0 %v610
        %752 = vmatpush.xpose.msra.mxu0 %v607
        %753 = vmatpush.xpose.msra.mxu0 %v604
        %754 = vmatmul.f32.gmra.mxu0 %v448
        %v755 = vpop.f32.mrf.mxu0
        %v756 = vadd.f32 %v429, %v755
        %757 = vmatmul.f32.gmra.mxu0 %v451
        %v758 = vpop.f32.mrf.mxu0
        %v759 = vadd.f32 %v434, %v758
        %760 = vmatmul.f32.gmra.mxu0 %v454
        %v761 = vpop.f32.mrf.mxu0
        %v762 = vadd.f32 %v439, %v761
        %763 = vmatmul.f32.gmra.mxu0 %v457
        %v764 = vpop.f32.mrf.mxu0
        %v765 = vadd.f32 %v444, %v764
        %766 = vdwg.mxu0
        %v767 = vtanh.pop %v669
        %v768 = vtanh.pop %v698
        %v769 = vtanh.pop %v727
        %v770 = vtanh.pop %v756
        %v771 = vtanh.pop %v672
        %v772 = vtanh.pop %v701
        %v773 = vtanh.pop %v730
        %v774 = vtanh.pop %v759
        %v775 = vtanh.pop %v675
        %v776 = vtanh.pop %v704
        %v777 = vtanh.pop %v733
        %v778 = vtanh.pop %v762
        %v779 = vtanh.pop %v678
        %v780 = vtanh.pop %v707
        %v781 = vtanh.pop %v736
        %v782 = vtanh.pop %v765
        %v783 = vld [vmem:[%s3] sm:$0xff]
        %v784 = vld [vmem:[%s3 + $0x8] sm:$0xff]
        %v785 = vld [vmem:[%s3 + $0x10] sm:$0xff]
        %v786 = vld [vmem:[%s3 + $0x18] sm:$0xff]
        %v787 = vld [vmem:[%s4] sm:$0xff]
        %v788 = vld [vmem:[%s4 + $0x8] sm:$0xff]
        %v789 = vld [vmem:[%s4 + $0x10] sm:$0xff]
        %v790 = vld [vmem:[%s4 + $0x18] sm:$0xff]
        %792 = vset.pattern.permute.xlu0 0
        %793 = vperm.xlu0 %792, %v787
        %v794 = vpop.permute.xlu0 %793
        %797 = vset.pattern.permute.xlu0 0
        %798 = vperm.xlu0 %797, %v788
        %v799 = vpop.permute.xlu0 %798
        %802 = vset.pattern.permute.xlu0 0
        %803 = vperm.xlu0 %802, %v789
        %v804 = vpop.permute.xlu0 %803
        %807 = vset.pattern.permute.xlu0 0
        %808 = vperm.xlu0 %807, %v790
        %v809 = vpop.permute.xlu0 %808
        %vm811 = vcmask 261120
        %v813 = vsel %vm811, %v783, 0
        %v816 = vsel %vm811, %v784, 0
        %v819 = vsel %vm811, %v785, 0
        %v822 = vsel %vm811, %v786, 0
        %824 = vmatpush.msra.mxu0 0.0
        %825 = vmatpush.msra.mxu0 0.0
        %826 = vmatpush.msra.mxu0 0.0
        %827 = vmatpush.msra.mxu0 0.0
        %828 = vmatpush.msra.mxu0 0.0
        %829 = vmatpush.msra.mxu0 0.0
        %830 = vmatpush.msra.mxu0 0.0
        %831 = vmatpush.msra.mxu0 0.0
        %832 = vmatpush.msra.mxu0 0.0
        %833 = vmatpush.msra.mxu0 0.0
        %834 = vmatpush.msra.mxu0 0.0
        %835 = vmatpush.msra.mxu0 0.0
        %836 = vmatpush.msra.mxu0 %v779
        %837 = vmatpush.msra.mxu0 %v775
        %838 = vmatpush.msra.mxu0 %v771
        %839 = vmatpush.msra.mxu0 %v767
        %840 = vmatmul.f32.gmra.mxu0 %v813
        %v841 = vpop.f32.mrf.mxu0
        %v842 = vadd.f32 %v794, %v841
        %843 = vmatmul.f32.gmra.mxu0 %v816
        %v844 = vpop.f32.mrf.mxu0
        %v845 = vadd.f32 %v799, %v844
        %846 = vmatmul.f32.gmra.mxu0 %v819
        %v847 = vpop.f32.mrf.mxu0
        %v848 = vadd.f32 %v804, %v847
        %849 = vmatmul.f32.gmra.mxu0 %v822
        %v850 = vpop.f32.mrf.mxu0
        %v851 = vadd.f32 %v809, %v850
        %852 = vdwg.mxu0
        %853 = vmatpush.msra.mxu0 0.0
        %854 = vmatpush.msra.mxu0 0.0
        %855 = vmatpush.msra.mxu0 0.0
        %856 = vmatpush.msra.mxu0 0.0
        %857 = vmatpush.msra.mxu0 0.0
        %858 = vmatpush.msra.mxu0 0.0
        %859 = vmatpush.msra.mxu0 0.0
        %860 = vmatpush.msra.mxu0 0.0
        %861 = vmatpush.msra.mxu0 0.0
        %862 = vmatpush.msra.mxu0 0.0
        %863 = vmatpush.msra.mxu0 0.0
        %864 = vmatpush.msra.mxu0 0.0
        %865 = vmatpush.msra.mxu0 %v780
        %866 = vmatpush.msra.mxu0 %v776
        %867 = vmatpush.msra.mxu0 %v772
        %868 = vmatpush.msra.mxu0 %v768
        %869 = vmatmul.f32.gmra.mxu0 %v813
        %v870 = vpop.f32.mrf.mxu0
        %v871 = vadd.f32 %v794, %v870
        %872 = vmatmul.f32.gmra.mxu0 %v816
        %v873 = vpop.f32.mrf.mxu0
        %v874 = vadd.f32 %v799, %v873
        %875 = vmatmul.f32.gmra.mxu0 %v819
        %v876 = vpop.f32.mrf.mxu0
        %v877 = vadd.f32 %v804, %v876
        %878 = vmatmul.f32.gmra.mxu0 %v822
        %v879 = vpop.f32.mrf.mxu0
        %v880 = vadd.f32 %v809, %v879
        %881 = vdwg.mxu0
        %882 = vmatpush.msra.mxu0 0.0
        %883 = vmatpush.msra.mxu0 0.0
        %884 = vmatpush.msra.mxu0 0.0
        %885 = vmatpush.msra.mxu0 0.0
        %886 = vmatpush.msra.mxu0 0.0
        %887 = vmatpush.msra.mxu0 0.0
        %888 = vmatpush.msra.mxu0 0.0
        %889 = vmatpush.msra.mxu0 0.0
        %890 = vmatpush.msra.mxu0 0.0
        %891 = vmatpush.msra.mxu0 0.0
        %892 = vmatpush.msra.mxu0 0.0
        %893 = vmatpush.msra.mxu0 0.0
        %894 = vmatpush.msra.mxu0 %v781
        %895 = vmatpush.msra.mxu0 %v777
        %896 = vmatpush.msra.mxu0 %v773
        %897 = vmatpush.msra.mxu0 %v769
        %898 = vmatmul.f32.gmra.mxu0 %v813
        %v899 = vpop.f32.mrf.mxu0
        %v900 = vadd.f32 %v794, %v899
        %901 = vmatmul.f32.gmra.mxu0 %v816
        %v902 = vpop.f32.mrf.mxu0
        %v903 = vadd.f32 %v799, %v902
        %904 = vmatmul.f32.gmra.mxu0 %v819
        %v905 = vpop.f32.mrf.mxu0
        %v906 = vadd.f32 %v804, %v905
        %907 = vmatmul.f32.gmra.mxu0 %v822
        %v908 = vpop.f32.mrf.mxu0
        %v909 = vadd.f32 %v809, %v908
        %910 = vdwg.mxu0
        %911 = vmatpush.msra.mxu0 0.0
        %912 = vmatpush.msra.mxu0 0.0
        %913 = vmatpush.msra.mxu0 0.0
        %914 = vmatpush.msra.mxu0 0.0
        %915 = vmatpush.msra.mxu0 0.0
        %916 = vmatpush.msra.mxu0 0.0
        %917 = vmatpush.msra.mxu0 0.0
        %918 = vmatpush.msra.mxu0 0.0
        %919 = vmatpush.msra.mxu0 0.0
        %920 = vmatpush.msra.mxu0 0.0
        %921 = vmatpush.msra.mxu0 0.0
        %922 = vmatpush.msra.mxu0 0.0
        %923 = vmatpush.msra.mxu0 %v782
        %924 = vmatpush.msra.mxu0 %v778
        %925 = vmatpush.msra.mxu0 %v774
        %926 = vmatpush.msra.mxu0 %v770
        %927 = vmatmul.f32.gmra.mxu0 %v813
        %v928 = vpop.f32.mrf.mxu0
        %v929 = vadd.f32 %v794, %v928
        %930 = vmatmul.f32.gmra.mxu0 %v816
        %v931 = vpop.f32.mrf.mxu0
        %v932 = vadd.f32 %v799, %v931
        %933 = vmatmul.f32.gmra.mxu0 %v819
        %v934 = vpop.f32.mrf.mxu0
        %v935 = vadd.f32 %v804, %v934
        %936 = vmatmul.f32.gmra.mxu0 %v822
        %v937 = vpop.f32.mrf.mxu0
        %v938 = vadd.f32 %v809, %v937
        %939 = vdwg.mxu0
        %v940 = vtanh.pop %v842
        %v941 = vtanh.pop %v871
        %v942 = vtanh.pop %v900
        %v943 = vtanh.pop %v929
        %v944 = vtanh.pop %v845
        %v945 = vtanh.pop %v874
        %v946 = vtanh.pop %v903
        %v947 = vtanh.pop %v932
        %v948 = vtanh.pop %v848
        %v949 = vtanh.pop %v877
        %v950 = vtanh.pop %v906
        %v951 = vtanh.pop %v935
        %v952 = vtanh.pop %v851
        %v953 = vtanh.pop %v880
        %v954 = vtanh.pop %v909
        %v955 = vtanh.pop %v938
        %v956 = vld [vmem:[%s5] sm:$0xff]
        %v957 = vld [vmem:[%s5 + $0x8] sm:$0xff]
        %v958 = vld [vmem:[%s5 + $0x10] sm:$0xff]
        %v959 = vld [vmem:[%s5 + $0x18] sm:$0xff]
        %v960 = vld [vmem:[%s6] sm:$0xff]
        %v961 = vld [vmem:[%s6 + $0x8] sm:$0xff]
        %v962 = vld [vmem:[%s6 + $0x10] sm:$0xff]
        %v963 = vld [vmem:[%s6 + $0x18] sm:$0xff]
        %965 = vset.pattern.permute.xlu0 0
        %966 = vperm.xlu0 %965, %v960
        %v967 = vpop.permute.xlu0 %966
        %970 = vset.pattern.permute.xlu0 0
        %971 = vperm.xlu0 %970, %v961
        %v972 = vpop.permute.xlu0 %971
        %975 = vset.pattern.permute.xlu0 0
        %976 = vperm.xlu0 %975, %v962
        %v977 = vpop.permute.xlu0 %976
        %980 = vset.pattern.permute.xlu0 0
        %981 = vperm.xlu0 %980, %v963
        %v982 = vpop.permute.xlu0 %981
        %v985 = vsel %vm811, %v956, 0
        %v988 = vsel %vm811, %v957, 0
        %v991 = vsel %vm811, %v958, 0
        %v994 = vsel %vm811, %v959, 0
        %996 = vmatpush.msra.mxu0 0.0
        %997 = vmatpush.msra.mxu0 0.0
        %998 = vmatpush.msra.mxu0 0.0
        %999 = vmatpush.msra.mxu0 0.0
        %1000 = vmatpush.msra.mxu0 0.0
        %1001 = vmatpush.msra.mxu0 0.0
        %1002 = vmatpush.msra.mxu0 0.0
        %1003 = vmatpush.msra.mxu0 0.0
        %1004 = vmatpush.msra.mxu0 0.0
        %1005 = vmatpush.msra.mxu0 0.0
        %1006 = vmatpush.msra.mxu0 0.0
        %1007 = vmatpush.msra.mxu0 0.0
        %1008 = vmatpush.msra.mxu0 %v952
        %1009 = vmatpush.msra.mxu0 %v948
        %1010 = vmatpush.msra.mxu0 %v944
        %1011 = vmatpush.msra.mxu0 %v940
        %1012 = vmatmul.f32.gmra.mxu0 %v985
        %v1013 = vpop.f32.mrf.mxu0
        %v1014 = vadd.f32 %v967, %v1013
        %1015 = vmatmul.f32.gmra.mxu0 %v988
        %v1016 = vpop.f32.mrf.mxu0
        %v1017 = vadd.f32 %v972, %v1016
        %1018 = vmatmul.f32.gmra.mxu0 %v991
        %v1019 = vpop.f32.mrf.mxu0
        %v1020 = vadd.f32 %v977, %v1019
        %1021 = vmatmul.f32.gmra.mxu0 %v994
        %v1022 = vpop.f32.mrf.mxu0
        %v1023 = vadd.f32 %v982, %v1022
        %1024 = vdwg.mxu0
        %1025 = vmatpush.msra.mxu0 0.0
        %1026 = vmatpush.msra.mxu0 0.0
        %1027 = vmatpush.msra.mxu0 0.0
        %1028 = vmatpush.msra.mxu0 0.0
        %1029 = vmatpush.msra.mxu0 0.0
        %1030 = vmatpush.msra.mxu0 0.0
        %1031 = vmatpush.msra.mxu0 0.0
        %1032 = vmatpush.msra.mxu0 0.0
        %1033 = vmatpush.msra.mxu0 0.0
        %1034 = vmatpush.msra.mxu0 0.0
        %1035 = vmatpush.msra.mxu0 0.0
        %1036 = vmatpush.msra.mxu0 0.0
        %1037 = vmatpush.msra.mxu0 %v953
        %1038 = vmatpush.msra.mxu0 %v949
        %1039 = vmatpush.msra.mxu0 %v945
        %1040 = vmatpush.msra.mxu0 %v941
        %1041 = vmatmul.f32.gmra.mxu0 %v985
        %v1042 = vpop.f32.mrf.mxu0
        %v1043 = vadd.f32 %v967, %v1042
        %1044 = vmatmul.f32.gmra.mxu0 %v988
        %v1045 = vpop.f32.mrf.mxu0
        %v1046 = vadd.f32 %v972, %v1045
        %1047 = vmatmul.f32.gmra.mxu0 %v991
        %v1048 = vpop.f32.mrf.mxu0
        %v1049 = vadd.f32 %v977, %v1048
        %1050 = vmatmul.f32.gmra.mxu0 %v994
        %v1051 = vpop.f32.mrf.mxu0
        %v1052 = vadd.f32 %v982, %v1051
        %1053 = vdwg.mxu0
        %1054 = vmatpush.msra.mxu0 0.0
        %1055 = vmatpush.msra.mxu0 0.0
        %1056 = vmatpush.msra.mxu0 0.0
        %1057 = vmatpush.msra.mxu0 0.0
        %1058 = vmatpush.msra.mxu0 0.0
        %1059 = vmatpush.msra.mxu0 0.0
        %1060 = vmatpush.msra.mxu0 0.0
        %1061 = vmatpush.msra.mxu0 0.0
        %1062 = vmatpush.msra.mxu0 0.0
        %1063 = vmatpush.msra.mxu0 0.0
        %1064 = vmatpush.msra.mxu0 0.0
        %1065 = vmatpush.msra.mxu0 0.0
        %1066 = vmatpush.msra.mxu0 %v954
        %1067 = vmatpush.msra.mxu0 %v950
        %1068 = vmatpush.msra.mxu0 %v946
        %1069 = vmatpush.msra.mxu0 %v942
        %1070 = vmatmul.f32.gmra.mxu0 %v985
        %v1071 = vpop.f32.mrf.mxu0
        %v1072 = vadd.f32 %v967, %v1071
        %1073 = vmatmul.f32.gmra.mxu0 %v988
        %v1074 = vpop.f32.mrf.mxu0
        %v1075 = vadd.f32 %v972, %v1074
        %1076 = vmatmul.f32.gmra.mxu0 %v991
        %v1077 = vpop.f32.mrf.mxu0
        %v1078 = vadd.f32 %v977, %v1077
        %1079 = vmatmul.f32.gmra.mxu0 %v994
        %v1080 = vpop.f32.mrf.mxu0
        %v1081 = vadd.f32 %v982, %v1080
        %1082 = vdwg.mxu0
        %1083 = vmatpush.msra.mxu0 0.0
        %1084 = vmatpush.msra.mxu0 0.0
        %1085 = vmatpush.msra.mxu0 0.0
        %1086 = vmatpush.msra.mxu0 0.0
        %1087 = vmatpush.msra.mxu0 0.0
        %1088 = vmatpush.msra.mxu0 0.0
        %1089 = vmatpush.msra.mxu0 0.0
        %1090 = vmatpush.msra.mxu0 0.0
        %1091 = vmatpush.msra.mxu0 0.0
        %1092 = vmatpush.msra.mxu0 0.0
        %1093 = vmatpush.msra.mxu0 0.0
        %1094 = vmatpush.msra.mxu0 0.0
        %1095 = vmatpush.msra.mxu0 %v955
        %1096 = vmatpush.msra.mxu0 %v951
        %1097 = vmatpush.msra.mxu0 %v947
        %1098 = vmatpush.msra.mxu0 %v943
        %1099 = vmatmul.f32.gmra.mxu0 %v985
        %v1100 = vpop.f32.mrf.mxu0
        %v1101 = vadd.f32 %v967, %v1100
        %1102 = vmatmul.f32.gmra.mxu0 %v988
        %v1103 = vpop.f32.mrf.mxu0
        %v1104 = vadd.f32 %v972, %v1103
        %1105 = vmatmul.f32.gmra.mxu0 %v991
        %v1106 = vpop.f32.mrf.mxu0
        %v1107 = vadd.f32 %v977, %v1106
        %1108 = vmatmul.f32.gmra.mxu0 %v994
        %v1109 = vpop.f32.mrf.mxu0
        %v1110 = vadd.f32 %v982, %v1109
        %1111 = vdwg.mxu0
        %v1112 = vtanh.pop %v1014
        %v1113 = vtanh.pop %v1043
        %v1114 = vtanh.pop %v1072
        %v1115 = vtanh.pop %v1101
        %v1116 = vtanh.pop %v1017
        %v1117 = vtanh.pop %v1046
        %v1118 = vtanh.pop %v1075
        %v1119 = vtanh.pop %v1104
        %v1120 = vtanh.pop %v1020
        %v1121 = vtanh.pop %v1049
        %v1122 = vtanh.pop %v1078
        %v1123 = vtanh.pop %v1107
        %v1124 = vtanh.pop %v1023
        %v1125 = vtanh.pop %v1052
        %v1126 = vtanh.pop %v1081
        %v1127 = vtanh.pop %v1110
        %v1128 = vld [vmem:[%s7] sm:$0xf]
        %v1129 = vld [vmem:[%s8] sm:$0xf]
        %1131 = vset.pattern.permute.xlu0 0
        %1132 = vperm.xlu0 %1131, %v1129
        %v1133 = vpop.permute.xlu0 %1132
        %v1136 = vsel %vm811, %v1128, 0
        %1138 = vmatpush.msra.mxu0 0.0
        %1139 = vmatpush.msra.mxu0 0.0
        %1140 = vmatpush.msra.mxu0 0.0
        %1141 = vmatpush.msra.mxu0 0.0
        %1142 = vmatpush.msra.mxu0 0.0
        %1143 = vmatpush.msra.mxu0 0.0
        %1144 = vmatpush.msra.mxu0 0.0
        %1145 = vmatpush.msra.mxu0 0.0
        %1146 = vmatpush.msra.mxu0 0.0
        %1147 = vmatpush.msra.mxu0 0.0
        %1148 = vmatpush.msra.mxu0 0.0
        %1149 = vmatpush.msra.mxu0 0.0
        %1150 = vmatpush.msra.mxu0 %v1124
        %1151 = vmatpush.msra.mxu0 %v1120
        %1152 = vmatpush.msra.mxu0 %v1116
        %1153 = vmatpush.msra.mxu0 %v1112
        %1154 = vmatmul.f32.gmra.mxu0 %v1136
        %v1155 = vpop.f32.mrf.mxu0
        %v1156 = vadd.f32 %v1133, %v1155
        %1157 = vdwg.mxu0
        %1158 = vmatpush.msra.mxu0 0.0
        %1159 = vmatpush.msra.mxu0 0.0
        %1160 = vmatpush.msra.mxu0 0.0
        %1161 = vmatpush.msra.mxu0 0.0
        %1162 = vmatpush.msra.mxu0 0.0
        %1163 = vmatpush.msra.mxu0 0.0
        %1164 = vmatpush.msra.mxu0 0.0
        %1165 = vmatpush.msra.mxu0 0.0
        %1166 = vmatpush.msra.mxu0 0.0
        %1167 = vmatpush.msra.mxu0 0.0
        %1168 = vmatpush.msra.mxu0 0.0
        %1169 = vmatpush.msra.mxu0 0.0
        %1170 = vmatpush.msra.mxu0 %v1125
        %1171 = vmatpush.msra.mxu0 %v1121
        %1172 = vmatpush.msra.mxu0 %v1117
        %1173 = vmatpush.msra.mxu0 %v1113
        %1174 = vmatmul.f32.gmra.mxu0 %v1136
        %v1175 = vpop.f32.mrf.mxu0
        %v1176 = vadd.f32 %v1133, %v1175
        %1177 = vdwg.mxu0
        %1178 = vmatpush.msra.mxu0 0.0
        %1179 = vmatpush.msra.mxu0 0.0
        %1180 = vmatpush.msra.mxu0 0.0
        %1181 = vmatpush.msra.mxu0 0.0
        %1182 = vmatpush.msra.mxu0 0.0
        %1183 = vmatpush.msra.mxu0 0.0
        %1184 = vmatpush.msra.mxu0 0.0
        %1185 = vmatpush.msra.mxu0 0.0
        %1186 = vmatpush.msra.mxu0 0.0
        %1187 = vmatpush.msra.mxu0 0.0
        %1188 = vmatpush.msra.mxu0 0.0
        %1189 = vmatpush.msra.mxu0 0.0
        %1190 = vmatpush.msra.mxu0 %v1126
        %1191 = vmatpush.msra.mxu0 %v1122
        %1192 = vmatpush.msra.mxu0 %v1118
        %1193 = vmatpush.msra.mxu0 %v1114
        %1194 = vmatmul.f32.gmra.mxu0 %v1136
        %v1195 = vpop.f32.mrf.mxu0
        %v1196 = vadd.f32 %v1133, %v1195
        %1197 = vdwg.mxu0
        %1198 = vmatpush.msra.mxu0 0.0
        %1199 = vmatpush.msra.mxu0 0.0
        %1200 = vmatpush.msra.mxu0 0.0
        %1201 = vmatpush.msra.mxu0 0.0
        %1202 = vmatpush.msra.mxu0 0.0
        %1203 = vmatpush.msra.mxu0 0.0
        %1204 = vmatpush.msra.mxu0 0.0
        %1205 = vmatpush.msra.mxu0 0.0
        %1206 = vmatpush.msra.mxu0 0.0
        %1207 = vmatpush.msra.mxu0 0.0
        %1208 = vmatpush.msra.mxu0 0.0
        %1209 = vmatpush.msra.mxu0 0.0
        %1210 = vmatpush.msra.mxu0 %v1127
        %1211 = vmatpush.msra.mxu0 %v1123
        %1212 = vmatpush.msra.mxu0 %v1119
        %1213 = vmatpush.msra.mxu0 %v1115
        %1214 = vmatmul.f32.gmra.mxu0 %v1136
        %v1215 = vpop.f32.mrf.mxu0
        %v1216 = vadd.f32 %v1133, %v1215
        %1217 = vdwg.mxu0
        %v1222 = vrot.slane %v1176, 4
        %v1223 = vrot.slane %v1216, 4
        %vm1224 = vcmask 1043456
        %v1225 = vsel %vm1224, %v1156, %v1222
        %v1226 = vsel %vm1224, %v1196, %v1223
        %1229 = vst [vmem:[%s338] sm:$0xff] %v1225
        %1230 = vst [vmem:[%s338 + $0x8] sm:$0xff] %v1226
        %s1231 = sand.u32 %s225, 1
        %s1232 = scalar_lea.sflag [#allocation3], %s1231
        %s1233 = sand.u32 %s225, 1
        %s1234 = smul.addr %s1233, 16
        %s1235 = scalar_lea.vmem [#allocation2], %s1234
        // Predicated region
        $region57: #{tpu_custom_call.1} parent=55 // pred_check
          %p1236 = pneg %p235
        $region58: #{tpu_custom_call.1} parent=55 // pred_check_branch
          %1238 = sbr.rel (%p1236) target = $region60
        $region59: #{tpu_custom_call.1} parent=55 // pred_region
          %s1239 = smul.u32 4, %s23
          %1241 = vsyncadd %s1232, 0
          %s1242 = smul.addr %s1239, 4
          %s1243 = scalar_lea.hbm %s9, %s1242
          %s1245 = sshll.u32 %s1235, 4
          %s1246 = int_to_ptr.vmem [resolvable:$true] %s1245
          %s1247 = sshll.u32 %s1243, 4
          %s1248 = int_to_ptr.hbm [resolvable:$true] %s1247
          %1250 = dma.vmem_to_hbm [thread:$0]  %s1246, 256, %s1248, %s1232
        $region60: #{tpu_custom_call.1} parent=55 // pred_fallthru
          _
      $region56: #{tpu_custom_call.1} parent=5 // pred_fallthru
        _
      %p1251 = scmp.le.s32.totalorder 2, %s18
      // Predicated region
      $region61: #{tpu_custom_call.1} parent=5 // pred_check
        %p1252 = pneg %p1251
      $region62: #{tpu_custom_call.1} parent=5 // pred_check_branch
        %1254 = sbr.rel (%p1252) target = $region64
      $region63: #{tpu_custom_call.1} parent=5 // pred_region
        %s1255 = ssub.s32 %s18, 2
        // Predicated region
        $region65: #{tpu_custom_call.1} parent=63 // pred_check
          %p1256 = pneg %p241
        $region66: #{tpu_custom_call.1} parent=63 // pred_check_branch
          %1258 = sbr.rel (%p1256) target = $region68
        $region67: #{tpu_custom_call.1} parent=63 // pred_region
          %s1259 = sand.u32 %s226, 1
          %s1260 = scalar_lea.sflag [#allocation3], %s1259
          %s1261 = sand.u32 %s226, 1
          %s1262 = smul.addr %s1261, 16
          %s1263 = scalar_lea.vmem [#allocation2], %s1262
          %1265 = dma.done %s1260, 256
        $region68: #{tpu_custom_call.1} parent=63 // pred_fallthru
          _
      $region64: #{tpu_custom_call.1} parent=5 // pred_fallthru
        _
    $region6: #{tpu_custom_call.1} parent=1 // loop_footer
      %s22 = sadd.s32 1, %s18
    $region7: #{tpu_custom_call.1} parent=1 // loop_footer_branch
      %17 = sbr.rel target = $region3
    $region8: #{tpu_custom_call.1} parent=1 // loop_exit
      _
    %1266 = vsyncpa [#allocation3], 1
    %s1267 = scalar_lea.sflag [#allocation3], 1
    %1268 = vsyncpa %s1267, 1

</llo_original>
